<compile_context>
chip_gen: v6e
topology: v6e:2x2x1
jax: 0.10.0
libtpu: 0.0.40
codegen_flags: <defaults>
</compile_context>

<pallas_src>
import functools

import jax
import jax.numpy as jnp
from jax.experimental import pallas as pl
from jax.experimental.pallas import tpu as pltpu

IN_F = 6        # input features
HID = 64        # true hidden width
HID_PAD = 128   # hidden padded to a full 128 lane/sublane group
OUT_F = 4       # true output features
OUT_PAD = 8     # output padded to a full sublane group (unmasked vst / MXU pop)
LANES = 128     # vreg lane width == inner batch-chunk size


def _mlp_kernel(x_ref, w1b_ref, b1b_ref, w2t_ref, b2t_ref, o_ref):
    """One batch tile of  y = relu(x @ W1 + b1) @ W2 + b2, feature-major.

    x_ref   : (IN_F,  TB)            f32   batch on the 128-lane axis
    w1b_ref : (IN_F,  HID_PAD, 128)  f32   W1, zero-padded + lane-pre-broadcast
    b1b_ref : (HID_PAD, 128)         f32   b1, zero-padded + lane-pre-broadcast
    w2t_ref : (OUT_PAD, HID_PAD)     bf16  W2^T, zero-padded 4 -> 8 rows
    b2t_ref : (OUT_PAD, 1)           f32
    o_ref   : (OUT_PAD, TB)          f32
    """
    tb = o_ref.shape[1]
    w2t = w2t_ref[...]                                    # (8, 128)  bf16
    b2t = b2t_ref[...]                                    # (8, 1)    f32

    # Static unroll over 128-lane batch chunks: the accumulator is
    # (HID_PAD, 128) f32 = 16 vregs, so it stays register-resident instead of
    # spilling through the store slot, and chunk c's MXU dot overlaps chunk
    # (c+1)'s VPU FMAs under the LLO scheduler.
    for c in range(tb // LANES):
        cols = pl.ds(c * LANES, LANES)                    # static offsets
        xc = x_ref[:, cols]                               # (6, 128)   f32
        acc = b1b_ref[...]                                # (128, 128) f32
        for k in range(IN_F):                             # K = 6, fully unrolled
            # VPU FMA: xc row k sublane-broadcasts; W1 column k is pre-broadcast.
            acc = acc + w1b_ref[k] * xc[k:k + 1, :]
        h = jnp.maximum(acc, 0.0).astype(jnp.bfloat16)    # ReLU -> bf16 for MXU
        # Layer 2: single-pass bf16 MXU dot, f32 accumulation, (8, 128) result.
        y = jnp.dot(w2t, h, preferred_element_type=jnp.float32)
        o_ref[:, cols] = (y + b2t).astype(o_ref.dtype)


def prepare_params(w1, b1, w2, b2):
    """One-time repack for the kernel.

    Math-layout inputs (y = relu(x @ w1 + b1) @ w2 + b2, i.e. PyTorch weights
    transposed): w1:(6,64), b1:(64,), w2:(64,4), b2:(4,).
    """
    w1p = jnp.zeros((IN_F, HID_PAD), jnp.float32).at[:, :HID].set(w1)
    w1b = jnp.broadcast_to(w1p[:, :, None], (IN_F, HID_PAD, LANES))        # (6,128,128)
    b1p = jnp.zeros((HID_PAD,), jnp.float32).at[:HID].set(b1)
    b1b = jnp.broadcast_to(b1p[:, None], (HID_PAD, LANES))                 # (128,128)
    w2t = (jnp.zeros((OUT_PAD, HID_PAD), jnp.float32)
           .at[:OUT_F, :HID].set(w2.T)).astype(jnp.bfloat16)               # (8,128) bf16
    b2t = jnp.zeros((OUT_PAD, 1), jnp.float32).at[:OUT_F, 0].set(b2)       # (8,1)
    return w1b, b1b, w2t, b2t


@functools.partial(jax.jit, static_argnames=("block_batch",))
def final_nn_forward_t(x_t, w1b, b1b, w2t, b2t, *, block_batch=4096):
    """Feature-major entry point: x_t (6, B) f32 -> (4, B) f32.  No layout ops."""
    assert block_batch % LANES == 0, "batch tile must be a multiple of 128 lanes"
    B = x_t.shape[1]
    TB = min(block_batch, pl.cdiv(B, LANES) * LANES)      # 128-multiple batch tile
    grid = (pl.cdiv(B, TB),)                              # ragged last tile is fine

    flops = 2 * B * (IN_F * HID_PAD + HID_PAD * OUT_PAD)
    bytes_accessed = (4 * B * (IN_F + OUT_PAD)
                      + 4 * (IN_F + 1) * HID_PAD * LANES
                      + 2 * OUT_PAD * HID_PAD + 4 * OUT_PAD)

    out = pl.pallas_call(
        _mlp_kernel,
        out_shape=jax.ShapeDtypeStruct((OUT_PAD, B), jnp.float32),
        grid_spec=pltpu.PrefetchScalarGridSpec(
            num_scalar_prefetch=0,
            grid=grid,
            in_specs=[
                pl.BlockSpec((IN_F, TB), lambda i: (0, i)),                  # x tile
                pl.BlockSpec((IN_F, HID_PAD, LANES), lambda i: (0, 0, 0)),   # w1b (resident)
                pl.BlockSpec((HID_PAD, LANES), lambda i: (0, 0)),            # b1b (resident)
                pl.BlockSpec((OUT_PAD, HID_PAD), lambda i: (0, 0)),          # w2t (resident)
                pl.BlockSpec((OUT_PAD, 1), lambda i: (0, 0)),                # b2t (resident)
            ],
            out_specs=pl.BlockSpec((OUT_PAD, TB), lambda i: (0, i)),
        ),
        compiler_params=pltpu.CompilerParams(
            dimension_semantics=("parallel",),     # v7x: shard batch tiles over 2 TCs
            vmem_limit_bytes=32 * 1024 * 1024,
        ),
        cost_estimate=pl.CostEstimate(
            flops=flops, transcendentals=0, bytes_accessed=bytes_accessed),
    )(x_t, w1b, b1b, w2t, b2t)
    return out[:OUT_F]                                    # (4, B)


@functools.partial(jax.jit, static_argnames=("block_batch",))
def final_nn_forward(x, w1b, b1b, w2t, b2t, *, block_batch=4096):
    """PyTorch-layout wrapper: x (B, 6) f32 -> (B, 4) f32.

    The two transposes below are the only remaining layout ops; in a real
    pipeline keep activations feature-major and call final_nn_forward_t so
    they fuse into the producer / consumer.
    """
    out_t = final_nn_forward_t(x.astype(jnp.float32).T, w1b, b1b, w2t, b2t,
                               block_batch=block_batch)
    return out_t.T


def init_params(key):
    """Deterministic PyTorch-style (Kaiming-uniform-ish) init for both Linears."""
    k1, k2, k3, k4 = jax.random.split(key, 4)
    bound1 = 1.0 / jnp.sqrt(IN_F)
    bound2 = 1.0 / jnp.sqrt(HID)
    # Stored as (in, out) so the math is x @ W + b (== PyTorch x @ W.T + b).
    w1 = jax.random.uniform(k1, (IN_F, HID), jnp.float32, -bound1, bound1)
    b1 = jax.random.uniform(k2, (HID,), jnp.float32, -bound1, bound1)
    w2 = jax.random.uniform(k3, (HID, OUT_F), jnp.float32, -bound2, bound2)
    b2 = jax.random.uniform(k4, (OUT_F,), jnp.float32, -bound2, bound2)
    return w1, b1, w2, b2


def reference_forward(x, w1, b1, w2, b2):
    h = jnp.maximum(x @ w1 + b1, 0.0)
    return h @ w2 + b2


if __name__ == "__main__":
    key = jax.random.PRNGKey(0)
    kx, kp = jax.random.split(key)

    w1, b1, w2, b2 = init_params(kp)
    params = prepare_params(w1, b1, w2, b2)

    # Layer-2 runs with bf16 operands (per review) -> compare against the f32
    # reference at a correspondingly relaxed tolerance.
    tol = dict(atol=3e-2, rtol=3e-2)

    # Small batch: single grid tile, single 128-lane chunk, ragged columns.
    x_small = jax.random.normal(kx, (8, IN_F), jnp.float32)
    out_small = jax.block_until_ready(final_nn_forward(x_small, *params))
    ref_small = reference_forward(x_small, w1, b1, w2, b2)
    assert out_small.shape == (8, OUT_F)
    assert jnp.allclose(out_small, ref_small, **tol), "mismatch (small)"

    # Ragged batch: 2 grid tiles x 2 inner chunks, ragged last tile (no jnp.pad).
    x_multi = jax.random.normal(kx, (300, IN_F), jnp.float32)
    out_multi = jax.block_until_ready(
        final_nn_forward(x_multi, *params, block_batch=256))
    ref_multi = reference_forward(x_multi, w1, b1, w2, b2)
    assert out_multi.shape == (300, OUT_F)
    assert jnp.allclose(out_multi, ref_multi, **tol), "mismatch (multi)"

    # Feature-major production path (no layout round trips at all).
    out_t = jax.block_until_ready(final_nn_forward_t(x_multi.T, *params))
    assert out_t.shape == (OUT_F, 300)
    assert jnp.allclose(out_t.T, ref_multi, **tol), "mismatch (feature-major)"

    print("KERNEL_OK")
</pallas_src>

<mosaic_0001>
module attributes {stable_mosaic.version = 11 : i64} {
  func.func @_mlp_kernel(%arg0: i32, %arg1: memref<6x128xf32, #tpu.memory_space<vmem>>, %arg2: memref<6x128x128xf32, #tpu.memory_space<vmem>>, %arg3: memref<128x128xf32, #tpu.memory_space<vmem>>, %arg4: memref<8x128xbf16, #tpu.memory_space<vmem>>, %arg5: memref<8x1xf32, #tpu.memory_space<vmem>>, %arg6: memref<8x128xf32, #tpu.memory_space<vmem>>) attributes {dimension_semantics = [#tpu.dimension_semantics<parallel>], iteration_bounds = array<i64: 1>, scalar_prefetch = 0 : i64, scratch_operands = 0 : i64, tpu.core_type = #tpu.core_type<tc>, window_params = [{transform_indices = @transform_0, window_bounds = array<i64: 6, 128>}, {pipeline_mode = #tpu.pipeline_mode<synchronous>, transform_indices = @transform_1, window_bounds = array<i64: 6, 128, 128>}, {pipeline_mode = #tpu.pipeline_mode<synchronous>, transform_indices = @transform_2, window_bounds = array<i64: 128, 128>}, {pipeline_mode = #tpu.pipeline_mode<synchronous>, transform_indices = @transform_3, window_bounds = array<i64: 8, 128>}, {pipeline_mode = #tpu.pipeline_mode<synchronous>, transform_indices = @transform_4, window_bounds = array<i64: 8, 1>}, {transform_indices = @transform_5, window_bounds = array<i64: 8, 128>}]} {
    %c0 = arith.constant 0 : index
    %c0_0 = arith.constant 0 : index
    %0 = vector.load %arg4[%c0, %c0_0] : memref<8x128xbf16, #tpu.memory_space<vmem>>, vector<8x128xbf16>
    %c0_1 = arith.constant 0 : index
    %c0_2 = arith.constant 0 : index
    %1 = vector.load %arg5[%c0_1, %c0_2] : memref<8x1xf32, #tpu.memory_space<vmem>>, vector<8x1xf32>
    %c0_3 = arith.constant 0 : index
    %c0_4 = arith.constant 0 : index
    %2 = vector.load %arg1[%c0_3, %c0_4] : memref<6x128xf32, #tpu.memory_space<vmem>>, vector<6x128xf32>
    %c0_5 = arith.constant 0 : index
    %c0_6 = arith.constant 0 : index
    %3 = vector.load %arg3[%c0_5, %c0_6] : memref<128x128xf32, #tpu.memory_space<vmem>>, vector<128x128xf32>
    %c0_7 = arith.constant 0 : index
    %c0_8 = arith.constant 0 : index
    %c0_9 = arith.constant 0 : index
    %4 = vector.load %arg2[%c0_7, %c0_8, %c0_9] : memref<6x128x128xf32, #tpu.memory_space<vmem>>, vector<1x128x128xf32>
    %5 = vector.shape_cast %4 : vector<1x128x128xf32> to vector<128x128xf32>
    %6 = vector.extract_strided_slice %2 {offsets = [0, 0], sizes = [1, 128], strides = [1, 1]} : vector<6x128xf32> to vector<1x128xf32>
    %7 = vector.broadcast %6 : vector<1x128xf32> to vector<128x128xf32>
    %8 = arith.mulf %5, %7 : vector<128x128xf32>
    %9 = arith.addf %3, %8 : vector<128x128xf32>
    %c1 = arith.constant 1 : index
    %c0_10 = arith.constant 0 : index
    %c0_11 = arith.constant 0 : index
    %10 = vector.load %arg2[%c1, %c0_10, %c0_11] : memref<6x128x128xf32, #tpu.memory_space<vmem>>, vector<1x128x128xf32>
    %11 = vector.shape_cast %10 : vector<1x128x128xf32> to vector<128x128xf32>
    %12 = vector.extract_strided_slice %2 {offsets = [1, 0], sizes = [1, 128], strides = [1, 1]} : vector<6x128xf32> to vector<1x128xf32>
    %13 = vector.broadcast %12 : vector<1x128xf32> to vector<128x128xf32>
    %14 = arith.mulf %11, %13 : vector<128x128xf32>
    %15 = arith.addf %9, %14 : vector<128x128xf32>
    %c2 = arith.constant 2 : index
    %c0_12 = arith.constant 0 : index
    %c0_13 = arith.constant 0 : index
    %16 = vector.load %arg2[%c2, %c0_12, %c0_13] : memref<6x128x128xf32, #tpu.memory_space<vmem>>, vector<1x128x128xf32>
    %17 = vector.shape_cast %16 : vector<1x128x128xf32> to vector<128x128xf32>
    %18 = vector.extract_strided_slice %2 {offsets = [2, 0], sizes = [1, 128], strides = [1, 1]} : vector<6x128xf32> to vector<1x128xf32>
    %19 = vector.broadcast %18 : vector<1x128xf32> to vector<128x128xf32>
    %20 = arith.mulf %17, %19 : vector<128x128xf32>
    %21 = arith.addf %15, %20 : vector<128x128xf32>
    %c3 = arith.constant 3 : index
    %c0_14 = arith.constant 0 : index
    %c0_15 = arith.constant 0 : index
    %22 = vector.load %arg2[%c3, %c0_14, %c0_15] : memref<6x128x128xf32, #tpu.memory_space<vmem>>, vector<1x128x128xf32>
    %23 = vector.shape_cast %22 : vector<1x128x128xf32> to vector<128x128xf32>
    %24 = vector.extract_strided_slice %2 {offsets = [3, 0], sizes = [1, 128], strides = [1, 1]} : vector<6x128xf32> to vector<1x128xf32>
    %25 = vector.broadcast %24 : vector<1x128xf32> to vector<128x128xf32>
    %26 = arith.mulf %23, %25 : vector<128x128xf32>
    %27 = arith.addf %21, %26 : vector<128x128xf32>
    %c4 = arith.constant 4 : index
    %c0_16 = arith.constant 0 : index
    %c0_17 = arith.constant 0 : index
    %28 = vector.load %arg2[%c4, %c0_16, %c0_17] : memref<6x128x128xf32, #tpu.memory_space<vmem>>, vector<1x128x128xf32>
    %29 = vector.shape_cast %28 : vector<1x128x128xf32> to vector<128x128xf32>
    %30 = vector.extract_strided_slice %2 {offsets = [4, 0], sizes = [1, 128], strides = [1, 1]} : vector<6x128xf32> to vector<1x128xf32>
    %31 = vector.broadcast %30 : vector<1x128xf32> to vector<128x128xf32>
    %32 = arith.mulf %29, %31 : vector<128x128xf32>
    %33 = arith.addf %27, %32 : vector<128x128xf32>
    %c5 = arith.constant 5 : index
    %c0_18 = arith.constant 0 : index
    %c0_19 = arith.constant 0 : index
    %34 = vector.load %arg2[%c5, %c0_18, %c0_19] : memref<6x128x128xf32, #tpu.memory_space<vmem>>, vector<1x128x128xf32>
    %35 = vector.shape_cast %34 : vector<1x128x128xf32> to vector<128x128xf32>
    %36 = vector.extract_strided_slice %2 {offsets = [5, 0], sizes = [1, 128], strides = [1, 1]} : vector<6x128xf32> to vector<1x128xf32>
    %37 = vector.broadcast %36 : vector<1x128xf32> to vector<128x128xf32>
    %38 = arith.mulf %35, %37 : vector<128x128xf32>
    %39 = arith.addf %33, %38 : vector<128x128xf32>
    %cst = arith.constant 0.000000e+00 : f32
    %40 = vector.broadcast %cst : f32 to vector<128x128xf32>
    %41 = arith.maximumf %39, %40 : vector<128x128xf32>
    %42 = arith.truncf %41 : vector<128x128xf32> to vector<128x128xbf16>
    %cst_20 = arith.constant dense<0.000000e+00> : vector<8x128xf32>
    %43 = tpu.matmul %0, %42, %cst_20 {dimension_numbers = #tpu.dot_dimension_numbers<[1], [0], [0], [1], [0, 0, 1, 1], [], []>} : vector<8x128xbf16>, vector<128x128xbf16>, vector<8x128xf32> -> vector<8x128xf32>
    %44 = vector.broadcast %1 : vector<8x1xf32> to vector<8x128xf32>
    %45 = arith.addf %43, %44 : vector<8x128xf32>
    %c0_21 = arith.constant 0 : index
    %c0_22 = arith.constant 0 : index
    %46 = vector.load %arg6[%c0_21, %c0_22] : memref<8x128xf32, #tpu.memory_space<vmem>>, vector<8x128xf32>
    tpu.vector_store %arg6[%c0_21, %c0_22], %45 {strides = array<i32>} : memref<8x128xf32, #tpu.memory_space<vmem>>, vector<8x128xf32>,
    return
  }
  func.func @transform_0(%arg0: i32) -> (i32, i32) {
    %c0_i32 = arith.constant 0 : i32
    %c0_i32_0 = arith.constant 0 : i32
    return %c0_i32, %arg0 : i32, i32
  }
  func.func @transform_1(%arg0: i32) -> (i32, i32, i32) {
    %c0_i32 = arith.constant 0 : i32
    %c0_i32_0 = arith.constant 0 : i32
    %c0_i32_1 = arith.constant 0 : i32
    %c0_i32_2 = arith.constant 0 : i32
    return %c0_i32, %c0_i32_0, %c0_i32_1 : i32, i32, i32
  }
  func.func @transform_2(%arg0: i32) -> (i32, i32) {
    %c0_i32 = arith.constant 0 : i32
    %c0_i32_0 = arith.constant 0 : i32
    %c0_i32_1 = arith.constant 0 : i32
    return %c0_i32, %c0_i32_0 : i32, i32
  }
  func.func @transform_3(%arg0: i32) -> (i32, i32) {
    %c0_i32 = arith.constant 0 : i32
    %c0_i32_0 = arith.constant 0 : i32
    %c0_i32_1 = arith.constant 0 : i32
    return %c0_i32, %c0_i32_0 : i32, i32
  }
  func.func @transform_4(%arg0: i32) -> (i32, i32) {
    %c0_i32 = arith.constant 0 : i32
    %c0_i32_0 = arith.constant 0 : i32
    %c0_i32_1 = arith.constant 0 : i32
    return %c0_i32, %c0_i32_0 : i32, i32
  }
  func.func @transform_5(%arg0: i32) -> (i32, i32) {
    %c0_i32 = arith.constant 0 : i32
    %c0_i32_0 = arith.constant 0 : i32
    return %c0_i32, %arg0 : i32, i32
  }
}

</mosaic_0001>

<llo_original>
// kernel: final_nn_forward_t.1
$region0: #{final_nn_forward_t.1}
  #allocation0 [shape = 'u32[]', space=smem, size = 0x4, offset = 0x4, fixed_abs, tag = 'smem constant byte address 0x4 - core index']
  #allocation1 [shape = 'u32[144,128]{1,0:T(1,128)}', space=vmem, size = 0x12000, scoped, tag = 'internal scratch']
  %s0 = inlined_call_operand.vmem [shape: f32[6,8], index: 0, kind: input, shape index: {}]
  %s1 = inlined_call_operand.hbm [shape: f32[6,128,128], index: 1, kind: input, shape index: {}]
  %s2 = inlined_call_operand.hbm [shape: f32[128,128], index: 2, kind: input, shape index: {}]
  %s3 = inlined_call_operand.vmem [shape: bf16[8,128], index: 3, kind: input, shape index: {}]
  %s4 = inlined_call_operand.vmem [shape: f32[8,1], index: 4, kind: input, shape index: {}]
  %s5 = inlined_call_operand.vmem [shape: f32[8,8], index: 5, kind: output, shape index: {}]
  %s6 = sld [smem:[#allocation0]]
  $region38: #{final_nn_forward_t.1} parent=0
    _
  %s8 = ssub.s32 1, %s6
  %s9 = scalar_select 0, %s8, %s6
  $region1: #{final_nn_forward_t.1} parent=0
    #allocation2 [shape = 'u8[393216]{0}', space=vmem, size = 0x60000, scoped, tag = 'input window, operand 1, single buffered']
    #allocation3 [shape = 's32[1]{0}', space=sflag, size = 0x4, scoped, tag = 'scoped memory for final_nn_forward_t.1']
    #allocation4 [shape = 'u8[65536]{0}', space=vmem, size = 0x10000, scoped, tag = 'input window, operand 2, single buffered']
    #allocation5 [shape = 's32[1]{0}', space=sflag, size = 0x4, scoped, tag = 'scoped memory for final_nn_forward_t.1']
    %10 = vsyncpa [#allocation3], 0
    %11 = vsyncpa [#allocation5], 0
    // Predicated region
    $region2: #{final_nn_forward_t.1} parent=1 // pred_check
      _
    $region3: #{final_nn_forward_t.1} parent=1 // pred_check_branch
      %13 = sbr.rel (0) target = $region5
    $region4: #{final_nn_forward_t.1} parent=1 // pred_region
      _
    $region5: #{final_nn_forward_t.1} parent=1 // pred_fallthru
      _
    // Predicated region
    $region6: #{final_nn_forward_t.1} parent=1 // pred_check
      _
    $region7: #{final_nn_forward_t.1} parent=1 // pred_check_branch
      %15 = sbr.rel (0) target = $region9
    $region8: #{final_nn_forward_t.1} parent=1 // pred_region
      %s17 = ssub.s32 12288, 12288
      %18 = vsyncadd [#allocation3], %s17
      %s19 = sshll.u32 [#allocation2], 4
      %s20 = int_to_ptr.vmem [resolvable:$true] %s19
      %25 = dma.hbm_to_vmem [thread:$0]  %s1, 12288, %s20, [#allocation3], 128, 128, 8
    $region9: #{final_nn_forward_t.1} parent=1 // pred_fallthru
      _
    // Predicated region
    $region10: #{final_nn_forward_t.1} parent=1 // pred_check
      _
    $region11: #{final_nn_forward_t.1} parent=1 // pred_check_branch
      %27 = sbr.rel (0) target = $region13
    $region12: #{final_nn_forward_t.1} parent=1 // pred_region
      %s29 = ssub.s32 2048, 2048
      %30 = vsyncadd [#allocation5], %s29
      %s31 = sshll.u32 [#allocation4], 4
      %s32 = int_to_ptr.vmem [resolvable:$true] %s31
      %37 = dma.hbm_to_vmem [thread:$0]  %s2, 2048, %s32, [#allocation5], 128, 128, 8
    $region13: #{final_nn_forward_t.1} parent=1 // pred_fallthru
      _
    // Predicated region
    $region14: #{final_nn_forward_t.1} parent=1 // pred_check
      _
    $region15: #{final_nn_forward_t.1} parent=1 // pred_check_branch
      %39 = sbr.rel (0) target = $region17
    $region16: #{final_nn_forward_t.1} parent=1 // pred_region
      _
    $region17: #{final_nn_forward_t.1} parent=1 // pred_fallthru
      _
    // Predicated region
    $region18: #{final_nn_forward_t.1} parent=1 // pred_check
      _
    $region19: #{final_nn_forward_t.1} parent=1 // pred_check_branch
      %41 = sbr.rel (0) target = $region21
    $region20: #{final_nn_forward_t.1} parent=1 // pred_region
      _
    $region21: #{final_nn_forward_t.1} parent=1 // pred_fallthru
      _
    // Predicated region
    $region22: #{final_nn_forward_t.1} parent=1 // pred_check
      _
    $region23: #{final_nn_forward_t.1} parent=1 // pred_check_branch
      %43 = sbr.rel (0) target = $region25
    $region24: #{final_nn_forward_t.1} parent=1 // pred_region
      %44 = dma.done [#allocation3], 12288
    $region25: #{final_nn_forward_t.1} parent=1 // pred_fallthru
      _
    // Predicated region
    $region26: #{final_nn_forward_t.1} parent=1 // pred_check
      _
    $region27: #{final_nn_forward_t.1} parent=1 // pred_check_branch
      %46 = sbr.rel (0) target = $region29
    $region28: #{final_nn_forward_t.1} parent=1 // pred_region
      %47 = dma.done [#allocation5], 2048
    $region29: #{final_nn_forward_t.1} parent=1 // pred_fallthru
      _
    %v49 = vld [vmem:[%s3] sm:$0xf]
    %v50 = vld [vmem:[%s4] sm:$0xff]
    %v51 = vld [vmem:[%s0] sm:$0x3f]
    %v52 = vld [vmem:[#allocation4] sm:$0xff]
    %v53 = vld [vmem:[#allocation4 + $0x8] sm:$0xff]
    %v54 = vld [vmem:[#allocation4 + $0x10] sm:$0xff]
    %v55 = vld [vmem:[#allocation4 + $0x18] sm:$0xff]
    %v56 = vld [vmem:[#allocation4 + $0x20] sm:$0xff]
    %v57 = vld [vmem:[#allocation4 + $0x28] sm:$0xff]
    %v58 = vld [vmem:[#allocation4 + $0x30] sm:$0xff]
    %v59 = vld [vmem:[#allocation4 + $0x38] sm:$0xff]
    %v60 = vld [vmem:[#allocation4 + $0x40] sm:$0xff]
    %v61 = vld [vmem:[#allocation4 + $0x48] sm:$0xff]
    %v62 = vld [vmem:[#allocation4 + $0x50] sm:$0xff]
    %v63 = vld [vmem:[#allocation4 + $0x58] sm:$0xff]
    %v64 = vld [vmem:[#allocation4 + $0x60] sm:$0xff]
    %v65 = vld [vmem:[#allocation4 + $0x68] sm:$0xff]
    %v66 = vld [vmem:[#allocation4 + $0x70] sm:$0xff]
    %v67 = vld [vmem:[#allocation4 + $0x78] sm:$0xff]
    %v68 = vld [vmem:[#allocation2] sm:$0xff]
    %v69 = vld [vmem:[#allocation2 + $0x8] sm:$0xff]
    %v70 = vld [vmem:[#allocation2 + $0x10] sm:$0xff]
    %v71 = vld [vmem:[#allocation2 + $0x18] sm:$0xff]
    %v72 = vld [vmem:[#allocation2 + $0x20] sm:$0xff]
    %v73 = vld [vmem:[#allocation2 + $0x28] sm:$0xff]
    %v74 = vld [vmem:[#allocation2 + $0x30] sm:$0xff]
    %v75 = vld [vmem:[#allocation2 + $0x38] sm:$0xff]
    %v76 = vld [vmem:[#allocation2 + $0x40] sm:$0xff]
    %v77 = vld [vmem:[#allocation2 + $0x48] sm:$0xff]
    %v78 = vld [vmem:[#allocation2 + $0x50] sm:$0xff]
    %v79 = vld [vmem:[#allocation2 + $0x58] sm:$0xff]
    %v80 = vld [vmem:[#allocation2 + $0x60] sm:$0xff]
    %v81 = vld [vmem:[#allocation2 + $0x68] sm:$0xff]
    %v82 = vld [vmem:[#allocation2 + $0x70] sm:$0xff]
    %v83 = vld [vmem:[#allocation2 + $0x78] sm:$0xff]
    %v84 = vlaneseq
    %v85 = vshrl.u32 %v84, 7
    %v86 = vsub.s32 0, %v85
    %v87 = vrot.slane %v51, %v86
    %v88 = vmul.f32 %v68, %v87
    %v89 = vmul.f32 %v69, %v87
    %v90 = vmul.f32 %v70, %v87
    %v91 = vmul.f32 %v71, %v87
    %v92 = vmul.f32 %v72, %v87
    %v93 = vmul.f32 %v73, %v87
    %v94 = vmul.f32 %v74, %v87
    %v95 = vmul.f32 %v75, %v87
    %v96 = vmul.f32 %v76, %v87
    %v97 = vmul.f32 %v77, %v87
    %v98 = vmul.f32 %v78, %v87
    %v99 = vmul.f32 %v79, %v87
    %v100 = vmul.f32 %v80, %v87
    %v101 = vmul.f32 %v81, %v87
    %v102 = vmul.f32 %v82, %v87
    %v103 = vmul.f32 %v83, %v87
    %v104 = vadd.f32 %v52, %v88
    %v105 = vadd.f32 %v53, %v89
    %v106 = vadd.f32 %v54, %v90
    %v107 = vadd.f32 %v55, %v91
    %v108 = vadd.f32 %v56, %v92
    %v109 = vadd.f32 %v57, %v93
    %v110 = vadd.f32 %v58, %v94
    %v111 = vadd.f32 %v59, %v95
    %v112 = vadd.f32 %v60, %v96
    %v113 = vadd.f32 %v61, %v97
    %v114 = vadd.f32 %v62, %v98
    %v115 = vadd.f32 %v63, %v99
    %v116 = vadd.f32 %v64, %v100
    %v117 = vadd.f32 %v65, %v101
    %v118 = vadd.f32 %v66, %v102
    %v119 = vadd.f32 %v67, %v103
    %s120 = scalar_lea.vmem [#allocation2], 128
    %v121 = vld [vmem:[%s120] sm:$0xff]
    %v122 = vld [vmem:[%s120 + $0x8] sm:$0xff]
    %v123 = vld [vmem:[%s120 + $0x10] sm:$0xff]
    %v124 = vld [vmem:[%s120 + $0x18] sm:$0xff]
    %v125 = vld [vmem:[%s120 + $0x20] sm:$0xff]
    %v126 = vld [vmem:[%s120 + $0x28] sm:$0xff]
    %v127 = vld [vmem:[%s120 + $0x30] sm:$0xff]
    %v128 = vld [vmem:[%s120 + $0x38] sm:$0xff]
    %v129 = vld [vmem:[%s120 + $0x40] sm:$0xff]
    %v130 = vld [vmem:[%s120 + $0x48] sm:$0xff]
    %v131 = vld [vmem:[%s120 + $0x50] sm:$0xff]
    %v132 = vld [vmem:[%s120 + $0x58] sm:$0xff]
    %v133 = vld [vmem:[%s120 + $0x60] sm:$0xff]
    %v134 = vld [vmem:[%s120 + $0x68] sm:$0xff]
    %v135 = vld [vmem:[%s120 + $0x70] sm:$0xff]
    %v136 = vld [vmem:[%s120 + $0x78] sm:$0xff]
    %v137 = vlaneseq
    %v138 = vshrl.u32 %v137, 7
    %v139 = vsub.s32 1, %v138
    %v140 = vrot.slane %v51, %v139
    %v141 = vmul.f32 %v121, %v140
    %v142 = vmul.f32 %v122, %v140
    %v143 = vmul.f32 %v123, %v140
    %v144 = vmul.f32 %v124, %v140
    %v145 = vmul.f32 %v125, %v140
    %v146 = vmul.f32 %v126, %v140
    %v147 = vmul.f32 %v127, %v140
    %v148 = vmul.f32 %v128, %v140
    %v149 = vmul.f32 %v129, %v140
    %v150 = vmul.f32 %v130, %v140
    %v151 = vmul.f32 %v131, %v140
    %v152 = vmul.f32 %v132, %v140
    %v153 = vmul.f32 %v133, %v140
    %v154 = vmul.f32 %v134, %v140
    %v155 = vmul.f32 %v135, %v140
    %v156 = vmul.f32 %v136, %v140
    %v157 = vadd.f32 %v104, %v141
    %v158 = vadd.f32 %v105, %v142
    %v159 = vadd.f32 %v106, %v143
    %v160 = vadd.f32 %v107, %v144
    %v161 = vadd.f32 %v108, %v145
    %v162 = vadd.f32 %v109, %v146
    %v163 = vadd.f32 %v110, %v147
    %v164 = vadd.f32 %v111, %v148
    %v165 = vadd.f32 %v112, %v149
    %v166 = vadd.f32 %v113, %v150
    %v167 = vadd.f32 %v114, %v151
    %v168 = vadd.f32 %v115, %v152
    %v169 = vadd.f32 %v116, %v153
    %v170 = vadd.f32 %v117, %v154
    %v171 = vadd.f32 %v118, %v155
    %v172 = vadd.f32 %v119, %v156
    %s173 = scalar_lea.vmem [#allocation2], 256
    %v174 = vld [vmem:[%s173] sm:$0xff]
    %v175 = vld [vmem:[%s173 + $0x8] sm:$0xff]
    %v176 = vld [vmem:[%s173 + $0x10] sm:$0xff]
    %v177 = vld [vmem:[%s173 + $0x18] sm:$0xff]
    %v178 = vld [vmem:[%s173 + $0x20] sm:$0xff]
    %v179 = vld [vmem:[%s173 + $0x28] sm:$0xff]
    %v180 = vld [vmem:[%s173 + $0x30] sm:$0xff]
    %v181 = vld [vmem:[%s173 + $0x38] sm:$0xff]
    %v182 = vld [vmem:[%s173 + $0x40] sm:$0xff]
    %v183 = vld [vmem:[%s173 + $0x48] sm:$0xff]
    %v184 = vld [vmem:[%s173 + $0x50] sm:$0xff]
    %v185 = vld [vmem:[%s173 + $0x58] sm:$0xff]
    %v186 = vld [vmem:[%s173 + $0x60] sm:$0xff]
    %v187 = vld [vmem:[%s173 + $0x68] sm:$0xff]
    %v188 = vld [vmem:[%s173 + $0x70] sm:$0xff]
    %v189 = vld [vmem:[%s173 + $0x78] sm:$0xff]
    %v190 = vlaneseq
    %v191 = vshrl.u32 %v190, 7
    %v192 = vsub.s32 2, %v191
    %v193 = vrot.slane %v51, %v192
    %v194 = vmul.f32 %v174, %v193
    %v195 = vmul.f32 %v175, %v193
    %v196 = vmul.f32 %v176, %v193
    %v197 = vmul.f32 %v177, %v193
    %v198 = vmul.f32 %v178, %v193
    %v199 = vmul.f32 %v179, %v193
    %v200 = vmul.f32 %v180, %v193
    %v201 = vmul.f32 %v181, %v193
    %v202 = vmul.f32 %v182, %v193
    %v203 = vmul.f32 %v183, %v193
    %v204 = vmul.f32 %v184, %v193
    %v205 = vmul.f32 %v185, %v193
    %v206 = vmul.f32 %v186, %v193
    %v207 = vmul.f32 %v187, %v193
    %v208 = vmul.f32 %v188, %v193
    %v209 = vmul.f32 %v189, %v193
    %v210 = vadd.f32 %v157, %v194
    %v211 = vadd.f32 %v158, %v195
    %v212 = vadd.f32 %v159, %v196
    %v213 = vadd.f32 %v160, %v197
    %v214 = vadd.f32 %v161, %v198
    %v215 = vadd.f32 %v162, %v199
    %v216 = vadd.f32 %v163, %v200
    %v217 = vadd.f32 %v164, %v201
    %v218 = vadd.f32 %v165, %v202
    %v219 = vadd.f32 %v166, %v203
    %v220 = vadd.f32 %v167, %v204
    %v221 = vadd.f32 %v168, %v205
    %v222 = vadd.f32 %v169, %v206
    %v223 = vadd.f32 %v170, %v207
    %v224 = vadd.f32 %v171, %v208
    %v225 = vadd.f32 %v172, %v209
    %s226 = scalar_lea.vmem [#allocation2], 384
    %v227 = vld [vmem:[%s226] sm:$0xff]
    %v228 = vld [vmem:[%s226 + $0x8] sm:$0xff]
    %v229 = vld [vmem:[%s226 + $0x10] sm:$0xff]
    %v230 = vld [vmem:[%s226 + $0x18] sm:$0xff]
    %v231 = vld [vmem:[%s226 + $0x20] sm:$0xff]
    %v232 = vld [vmem:[%s226 + $0x28] sm:$0xff]
    %v233 = vld [vmem:[%s226 + $0x30] sm:$0xff]
    %v234 = vld [vmem:[%s226 + $0x38] sm:$0xff]
    %v235 = vld [vmem:[%s226 + $0x40] sm:$0xff]
    %v236 = vld [vmem:[%s226 + $0x48] sm:$0xff]
    %v237 = vld [vmem:[%s226 + $0x50] sm:$0xff]
    %v238 = vld [vmem:[%s226 + $0x58] sm:$0xff]
    %v239 = vld [vmem:[%s226 + $0x60] sm:$0xff]
    %v240 = vld [vmem:[%s226 + $0x68] sm:$0xff]
    %v241 = vld [vmem:[%s226 + $0x70] sm:$0xff]
    %v242 = vld [vmem:[%s226 + $0x78] sm:$0xff]
    %v243 = vlaneseq
    %v244 = vshrl.u32 %v243, 7
    %v245 = vsub.s32 3, %v244
    %v246 = vrot.slane %v51, %v245
    %v247 = vmul.f32 %v227, %v246
    %v248 = vmul.f32 %v228, %v246
    %v249 = vmul.f32 %v229, %v246
    %v250 = vmul.f32 %v230, %v246
    %v251 = vmul.f32 %v231, %v246
    %v252 = vmul.f32 %v232, %v246
    %v253 = vmul.f32 %v233, %v246
    %v254 = vmul.f32 %v234, %v246
    %v255 = vmul.f32 %v235, %v246
    %v256 = vmul.f32 %v236, %v246
    %v257 = vmul.f32 %v237, %v246
    %v258 = vmul.f32 %v238, %v246
    %v259 = vmul.f32 %v239, %v246
    %v260 = vmul.f32 %v240, %v246
    %v261 = vmul.f32 %v241, %v246
    %v262 = vmul.f32 %v242, %v246
    %v263 = vadd.f32 %v210, %v247
    %v264 = vadd.f32 %v211, %v248
    %v265 = vadd.f32 %v212, %v249
    %v266 = vadd.f32 %v213, %v250
    %v267 = vadd.f32 %v214, %v251
    %v268 = vadd.f32 %v215, %v252
    %v269 = vadd.f32 %v216, %v253
    %v270 = vadd.f32 %v217, %v254
    %v271 = vadd.f32 %v218, %v255
    %v272 = vadd.f32 %v219, %v256
    %v273 = vadd.f32 %v220, %v257
    %v274 = vadd.f32 %v221, %v258
    %v275 = vadd.f32 %v222, %v259
    %v276 = vadd.f32 %v223, %v260
    %v277 = vadd.f32 %v224, %v261
    %v278 = vadd.f32 %v225, %v262
    %s279 = scalar_lea.vmem [#allocation2], 512
    %v280 = vld [vmem:[%s279] sm:$0xff]
    %v281 = vld [vmem:[%s279 + $0x8] sm:$0xff]
    %v282 = vld [vmem:[%s279 + $0x10] sm:$0xff]
    %v283 = vld [vmem:[%s279 + $0x18] sm:$0xff]
    %v284 = vld [vmem:[%s279 + $0x20] sm:$0xff]
    %v285 = vld [vmem:[%s279 + $0x28] sm:$0xff]
    %v286 = vld [vmem:[%s279 + $0x30] sm:$0xff]
    %v287 = vld [vmem:[%s279 + $0x38] sm:$0xff]
    %v288 = vld [vmem:[%s279 + $0x40] sm:$0xff]
    %v289 = vld [vmem:[%s279 + $0x48] sm:$0xff]
    %v290 = vld [vmem:[%s279 + $0x50] sm:$0xff]
    %v291 = vld [vmem:[%s279 + $0x58] sm:$0xff]
    %v292 = vld [vmem:[%s279 + $0x60] sm:$0xff]
    %v293 = vld [vmem:[%s279 + $0x68] sm:$0xff]
    %v294 = vld [vmem:[%s279 + $0x70] sm:$0xff]
    %v295 = vld [vmem:[%s279 + $0x78] sm:$0xff]
    %v296 = vlaneseq
    %v297 = vshrl.u32 %v296, 7
    %v298 = vsub.s32 4, %v297
    %v299 = vrot.slane %v51, %v298
    %v300 = vmul.f32 %v280, %v299
    %v301 = vmul.f32 %v281, %v299
    %v302 = vmul.f32 %v282, %v299
    %v303 = vmul.f32 %v283, %v299
    %v304 = vmul.f32 %v284, %v299
    %v305 = vmul.f32 %v285, %v299
    %v306 = vmul.f32 %v286, %v299
    %v307 = vmul.f32 %v287, %v299
    %v308 = vmul.f32 %v288, %v299
    %v309 = vmul.f32 %v289, %v299
    %v310 = vmul.f32 %v290, %v299
    %v311 = vmul.f32 %v291, %v299
    %v312 = vmul.f32 %v292, %v299
    %v313 = vmul.f32 %v293, %v299
    %v314 = vmul.f32 %v294, %v299
    %v315 = vmul.f32 %v295, %v299
    %v316 = vadd.f32 %v263, %v300
    %v317 = vadd.f32 %v264, %v301
    %v318 = vadd.f32 %v265, %v302
    %v319 = vadd.f32 %v266, %v303
    %v320 = vadd.f32 %v267, %v304
    %v321 = vadd.f32 %v268, %v305
    %v322 = vadd.f32 %v269, %v306
    %v323 = vadd.f32 %v270, %v307
    %v324 = vadd.f32 %v271, %v308
    %v325 = vadd.f32 %v272, %v309
    %v326 = vadd.f32 %v273, %v310
    %v327 = vadd.f32 %v274, %v311
    %v328 = vadd.f32 %v275, %v312
    %v329 = vadd.f32 %v276, %v313
    %v330 = vadd.f32 %v277, %v314
    %v331 = vadd.f32 %v278, %v315
    %s332 = scalar_lea.vmem [#allocation2], 640
    %v333 = vld [vmem:[%s332] sm:$0xff]
    %v334 = vld [vmem:[%s332 + $0x8] sm:$0xff]
    %v335 = vld [vmem:[%s332 + $0x10] sm:$0xff]
    %v336 = vld [vmem:[%s332 + $0x18] sm:$0xff]
    %v337 = vld [vmem:[%s332 + $0x20] sm:$0xff]
    %v338 = vld [vmem:[%s332 + $0x28] sm:$0xff]
    %v339 = vld [vmem:[%s332 + $0x30] sm:$0xff]
    %v340 = vld [vmem:[%s332 + $0x38] sm:$0xff]
    %v341 = vld [vmem:[%s332 + $0x40] sm:$0xff]
    %v342 = vld [vmem:[%s332 + $0x48] sm:$0xff]
    %v343 = vld [vmem:[%s332 + $0x50] sm:$0xff]
    %v344 = vld [vmem:[%s332 + $0x58] sm:$0xff]
    %v345 = vld [vmem:[%s332 + $0x60] sm:$0xff]
    %v346 = vld [vmem:[%s332 + $0x68] sm:$0xff]
    %v347 = vld [vmem:[%s332 + $0x70] sm:$0xff]
    %v348 = vld [vmem:[%s332 + $0x78] sm:$0xff]
    %v349 = vlaneseq
    %v350 = vshrl.u32 %v349, 7
    %v351 = vsub.s32 5, %v350
    %v352 = vrot.slane %v51, %v351
    %v353 = vmul.f32 %v333, %v352
    %v354 = vmul.f32 %v334, %v352
    %v355 = vmul.f32 %v335, %v352
    %v356 = vmul.f32 %v336, %v352
    %v357 = vmul.f32 %v337, %v352
    %v358 = vmul.f32 %v338, %v352
    %v359 = vmul.f32 %v339, %v352
    %v360 = vmul.f32 %v340, %v352
    %v361 = vmul.f32 %v341, %v352
    %v362 = vmul.f32 %v342, %v352
    %v363 = vmul.f32 %v343, %v352
    %v364 = vmul.f32 %v344, %v352
    %v365 = vmul.f32 %v345, %v352
    %v366 = vmul.f32 %v346, %v352
    %v367 = vmul.f32 %v347, %v352
    %v368 = vmul.f32 %v348, %v352
    %v369 = vadd.f32 %v316, %v353
    %v370 = vadd.f32 %v317, %v354
    %v371 = vadd.f32 %v318, %v355
    %v372 = vadd.f32 %v319, %v356
    %v373 = vadd.f32 %v320, %v357
    %v374 = vadd.f32 %v321, %v358
    %v375 = vadd.f32 %v322, %v359
    %v376 = vadd.f32 %v323, %v360
    %v377 = vadd.f32 %v324, %v361
    %v378 = vadd.f32 %v325, %v362
    %v379 = vadd.f32 %v326, %v363
    %v380 = vadd.f32 %v327, %v364
    %v381 = vadd.f32 %v328, %v365
    %v382 = vadd.f32 %v329, %v366
    %v383 = vadd.f32 %v330, %v367
    %v384 = vadd.f32 %v331, %v368
    %v385 = vmax.f32 %v369, 0.0
    %v386 = vmax.f32 %v370, 0.0
    %v387 = vmax.f32 %v371, 0.0
    %v388 = vmax.f32 %v372, 0.0
    %v389 = vmax.f32 %v373, 0.0
    %v390 = vmax.f32 %v374, 0.0
    %v391 = vmax.f32 %v375, 0.0
    %v392 = vmax.f32 %v376, 0.0
    %v393 = vmax.f32 %v377, 0.0
    %v394 = vmax.f32 %v378, 0.0
    %v395 = vmax.f32 %v379, 0.0
    %v396 = vmax.f32 %v380, 0.0
    %v397 = vmax.f32 %v381, 0.0
    %v398 = vmax.f32 %v382, 0.0
    %v399 = vmax.f32 %v383, 0.0
    %v400 = vmax.f32 %v384, 0.0
    %v401 = vpack.c.bf16 %v386, %v385
    %v402 = vpack.c.bf16 %v388, %v387
    %v403 = vpack.c.bf16 %v390, %v389
    %v404 = vpack.c.bf16 %v392, %v391
    %v405 = vpack.c.bf16 %v394, %v393
    %v406 = vpack.c.bf16 %v396, %v395
    %v407 = vpack.c.bf16 %v398, %v397
    %v408 = vpack.c.bf16 %v400, %v399
    %410 = vset.pattern.permute.xlu0 0
    %411 = vperm.xlu0 %410, %v50
    %v412 = vpop.permute.xlu0 %411
    %414 = vmatprep.subr.bf16.mxu0 0
    %415 = vmatpush1.bf16.msra.mxu0 %v408
    %416 = vmatprep.subr.bf16.mxu0 0
    %417 = vmatpush1.bf16.msra.mxu0 %v407
    %418 = vmatprep.subr.bf16.mxu0 0
    %419 = vmatpush1.bf16.msra.mxu0 %v406
    %420 = vmatprep.subr.bf16.mxu0 0
    %421 = vmatpush1.bf16.msra.mxu0 %v405
    %422 = vmatprep.subr.bf16.mxu0 0
    %423 = vmatpush1.bf16.msra.mxu0 %v404
    %424 = vmatprep.subr.bf16.mxu0 0
    %425 = vmatpush1.bf16.msra.mxu0 %v403
    %426 = vmatprep.subr.bf16.mxu0 0
    %427 = vmatpush1.bf16.msra.mxu0 %v402
    %428 = vmatprep.subr.bf16.mxu0 0
    %429 = vmatpush1.bf16.msra.mxu0 %v401
    %430 = vmatprep.subr.bf16.mxu0 0
    %431 = vmatpush2.bf16.msra.mxu0 0
    %432 = vmatprep.subr.bf16.mxu0 0
    %433 = vmatpush2.bf16.msra.mxu0 0
    %434 = vmatprep.subr.bf16.mxu0 0
    %435 = vmatpush2.bf16.msra.mxu0 0
    %436 = vmatprep.subr.bf16.mxu0 0
    %437 = vmatpush2.bf16.msra.mxu0 0
    %438 = vmatprep.subr.bf16.mxu0 0
    %439 = vmatpush2.bf16.msra.mxu0 0
    %440 = vmatprep.subr.bf16.mxu0 0
    %441 = vmatpush2.bf16.msra.mxu0 0
    %442 = vmatprep.subr.bf16.mxu0 0
    %443 = vmatpush2.bf16.msra.mxu0 0
    %444 = vmatprep.subr.bf16.mxu0 0
    %445 = vmatpush2.bf16.msra.mxu0 0
    %446 = vmatprep.mubr.bf16.mxu0 0
    %447 = vmatmul.mubr.bf16.gmra.mxu0 %v49
    %v448 = vpop.f32.mrf.mxu0
    %v449 = vadd.f32 %v412, %v448
    %v450 = vpop.f32.mrf.mxu0
    %v451 = vpop.f32.mrf.mxu0
    %v452 = vpop.f32.mrf.mxu0
    %453 = vdwg.mxu0
    %454 = vst [vmem:[%s5] sm:$0xff] %v449
    // Predicated region
    $region30: #{final_nn_forward_t.1} parent=1 // pred_check
      _
    $region31: #{final_nn_forward_t.1} parent=1 // pred_check_branch
      %456 = sbr.rel (0) target = $region33
    $region32: #{final_nn_forward_t.1} parent=1 // pred_region
      _
    $region33: #{final_nn_forward_t.1} parent=1 // pred_fallthru
      _
    // Predicated region
    $region34: #{final_nn_forward_t.1} parent=1 // pred_check
      _
    $region35: #{final_nn_forward_t.1} parent=1 // pred_check_branch
      %458 = sbr.rel (0) target = $region37
    $region36: #{final_nn_forward_t.1} parent=1 // pred_region
      _
    $region37: #{final_nn_forward_t.1} parent=1 // pred_fallthru
      _
    %459 = vsyncpa [#allocation3], 1
    %460 = vsyncpa [#allocation5], 1

</llo_original>
